<compile_context>
chip_gen: v5e
topology: v5e:2x2
jax: 0.10.0
libtpu: 0.0.40
codegen_flags: <defaults>
</compile_context>

<pallas_src>
import functools

import jax
import jax.numpy as jnp
from jax.experimental import pallas as pl
from jax.experimental.pallas import tpu as pltpu

_BN_EPS = 1e-5


def _block_kernel(seed_ref, x_ref, w_ref, b_ref, g_ref, bt_ref, o_ref, *,
                  if_bn: bool, if_dp: bool, p: float, batch_tiled: bool):
    x = x_ref[...]                                   # (bm, In)  or (B, In)
    w = w_ref[...]                                   # (In, Out) or (In, tn)

    # Linear: x @ W_t + b  (MXU matmul, f32 accumulation; W already (In, Out))
    y = jnp.dot(x, w, preferred_element_type=jnp.float32)
    y = y + b_ref[...].astype(jnp.float32)           # (1, n) broadcast

    if if_bn:
        gamma = g_ref[...].astype(jnp.float32)
        beta = bt_ref[...].astype(jnp.float32)
        inv_n = 1.0 / y.shape[0]

        def batch_norm(v):
            # Single reduction sweep: mean and E[v^2]; biased var, eps=1e-5
            mean = jnp.sum(v, axis=0, keepdims=True) * inv_n
            mean_sq = jnp.sum(v * v, axis=0, keepdims=True) * inv_n
            var = mean_sq - mean * mean
            return (v - mean) * jax.lax.rsqrt(var + _BN_EPS) * gamma + beta

        y = batch_norm(y)

    y = jnp.maximum(y, 0.0)                          # ReLU

    if if_bn:
        y = batch_norm(y)                            # same BN module applied twice

    if if_dp:
        # Inverted dropout (training mode).  Counter-based hash PRNG keyed on
        # (seed, global row, global col); integer-threshold keep mask.
        rows, cols = y.shape
        if batch_tiled:
            row_off = pl.program_id(0) * rows
            col_off = 0
        else:
            row_off = 0
            col_off = pl.program_id(0) * cols

        r = (jax.lax.broadcasted_iota(jnp.int32, (rows, cols), 0)
             + row_off).astype(jnp.uint32)
        c = (jax.lax.broadcasted_iota(jnp.int32, (rows, cols), 1)
             + col_off).astype(jnp.uint32)
        seed = seed_ref[0].astype(jnp.uint32)

        h = (r * jnp.uint32(0x9E3779B1)
             + c * jnp.uint32(0x85EBCA77)
             + seed * jnp.uint32(0xC2B2AE3D))
        h = h ^ (h >> jnp.uint32(15))
        h = h * jnp.uint32(0x2C1B3C6D)
        h = h ^ (h >> jnp.uint32(12))
        h = h * jnp.uint32(0x297A2D39)
        h = h ^ (h >> jnp.uint32(15))

        # Top 24 bits as non-negative int32; keep with probability (1 - p).
        bits24 = (h >> jnp.uint32(8)).astype(jnp.int32)
        thresh = jnp.int32(min(int(round(p * float(1 << 24))), (1 << 24) - 1))
        keep = bits24 >= thresh
        y = jnp.where(keep, y * (1.0 / (1.0 - p)), 0.0)

    o_ref[...] = y.astype(o_ref.dtype)


def _pick_tile(dim, candidates, align):
    for t in candidates:
        if t <= dim and dim % t == 0 and t % align == 0:
            return t
    return dim  # fall back to full extent (always legal for BlockSpec)


def block_forward(x, w, b, gamma, beta, seed=0, *, if_bn=False, if_dp=False,
                  p=0.2, compute_dtype=jnp.float32):
    """x: (B, In); w: (Out, In) [PyTorch layout]; b/gamma/beta: (Out,).

    compute_dtype: dtype fed to the MXU (jnp.bfloat16 recommended on v5e for
    ~2x HBM traffic reduction and full MXU rate; f32 accumulation either way).
    """
    B, In = x.shape
    Out = w.shape[0]

    # Pre-transpose weight to (In, Out): lanes map directly to output lanes.
    x_c = jnp.asarray(x).astype(compute_dtype)
    w_t = jnp.asarray(w).T.astype(compute_dtype)
    b2 = jnp.asarray(b).reshape(1, Out).astype(jnp.float32)
    g2 = jnp.asarray(gamma).reshape(1, Out).astype(jnp.float32)
    bt2 = jnp.asarray(beta).reshape(1, Out).astype(jnp.float32)
    seed_arr = jnp.asarray([seed], dtype=jnp.int32)

    if if_bn:
        # BN needs full-batch per-feature stats -> tile the Out (lane) dim.
        tn = _pick_tile(Out, (512, 256, 128), 128)
        grid = (Out // tn,)
        batch_tiled = False
        in_specs = [
            pl.BlockSpec((B, In), lambda j, *_: (0, 0)),    # x resident
            pl.BlockSpec((In, tn), lambda j, *_: (0, j)),
            pl.BlockSpec((1, tn), lambda j, *_: (0, j)),
            pl.BlockSpec((1, tn), lambda j, *_: (0, j)),
            pl.BlockSpec((1, tn), lambda j, *_: (0, j)),
        ]
        out_specs = pl.BlockSpec((B, tn), lambda j, *_: (0, j))
    else:
        # Elementwise tail is per-row -> tile the batch; weight stays resident.
        bm = _pick_tile(B, (1024, 512, 256, 128, 64, 32, 16, 8), 8)
        grid = (B // bm,)
        batch_tiled = True
        in_specs = [
            pl.BlockSpec((bm, In), lambda i, *_: (i, 0)),
            pl.BlockSpec((In, Out), lambda i, *_: (0, 0)),  # weight resident
            pl.BlockSpec((1, Out), lambda i, *_: (0, 0)),
            pl.BlockSpec((1, Out), lambda i, *_: (0, 0)),
            pl.BlockSpec((1, Out), lambda i, *_: (0, 0)),
        ]
        out_specs = pl.BlockSpec((bm, Out), lambda i, *_: (i, 0))

    kernel = functools.partial(_block_kernel, if_bn=if_bn, if_dp=if_dp, p=p,
                               batch_tiled=batch_tiled)

    grid_spec = pltpu.PrefetchScalarGridSpec(
        num_scalar_prefetch=1,          # seed lives in SMEM
        grid=grid,
        in_specs=in_specs,
        out_specs=out_specs,
    )

    return pl.pallas_call(
        kernel,
        grid_spec=grid_spec,
        out_shape=jax.ShapeDtypeStruct((B, Out), jnp.float32),
        compiler_params=pltpu.CompilerParams(
            dimension_semantics=("parallel",),
            vmem_limit_bytes=48 * 1024 * 1024,
        ),
    )(seed_arr, x_c, w_t, b2, g2, bt2)


def init_block_params(key, input_size, output_size):
    """Deterministic init matching nn.Linear defaults (uniform +/- 1/sqrt(fan_in))."""
    kw, kb = jax.random.split(key)
    bound = 1.0 / (input_size ** 0.5)
    w = jax.random.uniform(kw, (output_size, input_size), jnp.float32, -bound, bound)
    b = jax.random.uniform(kb, (output_size,), jnp.float32, -bound, bound)
    gamma = jnp.ones((output_size,), jnp.float32)   # BatchNorm1d weight init
    beta = jnp.zeros((output_size,), jnp.float32)   # BatchNorm1d bias init
    return w, b, gamma, beta


if __name__ == "__main__":
    key = jax.random.PRNGKey(0)
    k_in, k_param = jax.random.split(key)

    batch, input_size, output_size = 8, 32, 64
    x = jax.random.normal(k_in, (batch, input_size), jnp.float32)
    w, b, gamma, beta = init_block_params(k_param, input_size, output_size)

    # Plain: Linear + ReLU
    out_plain = block_forward(x, w, b, gamma, beta, seed=0, if_bn=False, if_dp=False)
    jax.block_until_ready(out_plain)

    # BatchNorm variant (same BN applied twice around ReLU, as in the reference)
    out_bn = block_forward(x, w, b, gamma, beta, seed=0, if_bn=True, if_dp=False)
    jax.block_until_ready(out_bn)

    # Dropout variant (training-mode inverted dropout, p=0.2)
    out_dp = block_forward(x, w, b, gamma, beta, seed=1234, if_bn=False, if_dp=True)
    jax.block_until_ready(out_dp)

    # ---- reference checks (pure JAX) ----
    lin = x @ w.T + b
    ref_plain = jnp.maximum(lin, 0.0)
    assert jnp.allclose(out_plain, ref_plain, atol=1e-5, rtol=1e-5)

    def bn_ref(v):
        mean = jnp.mean(v, axis=0, keepdims=True)
        var = jnp.mean((v - mean) ** 2, axis=0, keepdims=True)
        return (v - mean) / jnp.sqrt(var + _BN_EPS) * gamma + beta

    ref_bn = bn_ref(jnp.maximum(bn_ref(lin), 0.0))
    assert jnp.allclose(out_bn, ref_bn, atol=1e-4, rtol=1e-4)

    # Dropout outputs must be either 0 or ref/(1-p) elementwise.
    scaled = ref_plain / (1.0 - 0.2)
    ok = (jnp.abs(out_dp) < 1e-6) | (
        jnp.abs(out_dp - scaled) <= 1e-4 * (1.0 + jnp.abs(scaled)))
    assert bool(jnp.all(ok))

    print("KERNEL_OK")
</pallas_src>

<mosaic_0001>
module attributes {stable_mosaic.version = 11 : i64} {
  func.func @_block_kernel(%arg0: i32, %arg1: memref<1xi32, #tpu.memory_space<smem>>, %arg2: memref<8x32xf32, #tpu.memory_space<vmem>>, %arg3: memref<32x64xf32, #tpu.memory_space<vmem>>, %arg4: memref<1x64xf32, #tpu.memory_space<vmem>>, %arg5: memref<1x64xf32, #tpu.memory_space<vmem>>, %arg6: memref<1x64xf32, #tpu.memory_space<vmem>>, %arg7: memref<8x64xf32, #tpu.memory_space<vmem>>) attributes {dimension_semantics = [#tpu.dimension_semantics<parallel>], iteration_bounds = array<i64: 1>, scalar_prefetch = 1 : i64, scratch_operands = 0 : i64, tpu.core_type = #tpu.core_type<tc>, window_params = [{transform_indices = @transform_0, window_bounds = array<i64: 8, 32>}, {pipeline_mode = #tpu.pipeline_mode<synchronous>, transform_indices = @transform_1, window_bounds = array<i64: 32, 64>}, {pipeline_mode = #tpu.pipeline_mode<synchronous>, transform_indices = @transform_2, window_bounds = array<i64: 1, 64>}, {pipeline_mode = #tpu.pipeline_mode<synchronous>, transform_indices = @transform_3, window_bounds = array<i64: 1, 64>}, {pipeline_mode = #tpu.pipeline_mode<synchronous>, transform_indices = @transform_4, window_bounds = array<i64: 1, 64>}, {transform_indices = @transform_5, window_bounds = array<i64: 8, 64>}]} {
    %c0 = arith.constant 0 : index
    %c0_0 = arith.constant 0 : index
    %0 = vector.load %arg2[%c0, %c0_0] : memref<8x32xf32, #tpu.memory_space<vmem>>, vector<8x32xf32>
    %c0_1 = arith.constant 0 : index
    %c0_2 = arith.constant 0 : index
    %1 = vector.load %arg3[%c0_1, %c0_2] : memref<32x64xf32, #tpu.memory_space<vmem>>, vector<32x64xf32>
    %cst = arith.constant dense<0.000000e+00> : vector<8x64xf32>
    %2 = tpu.matmul %0, %1, %cst {dimension_numbers = #tpu.dot_dimension_numbers<[1], [0], [0], [1], [0, 0, 1, 1], [], []>} : vector<8x32xf32>, vector<32x64xf32>, vector<8x64xf32> -> vector<8x64xf32>
    %c0_3 = arith.constant 0 : index
    %c0_4 = arith.constant 0 : index
    %3 = vector.load %arg4[%c0_3, %c0_4] : memref<1x64xf32, #tpu.memory_space<vmem>>, vector<1x64xf32>
    %4 = vector.broadcast %3 : vector<1x64xf32> to vector<8x64xf32>
    %5 = arith.addf %2, %4 : vector<8x64xf32>
    %cst_5 = arith.constant 0.000000e+00 : f32
    %6 = vector.broadcast %cst_5 : f32 to vector<8x64xf32>
    %7 = arith.maximumf %5, %6 : vector<8x64xf32>
    %c0_6 = arith.constant 0 : index
    %c0_7 = arith.constant 0 : index
    %8 = vector.load %arg7[%c0_6, %c0_7] : memref<8x64xf32, #tpu.memory_space<vmem>>, vector<8x64xf32>
    tpu.vector_store %arg7[%c0_6, %c0_7], %7 {strides = array<i32>} : memref<8x64xf32, #tpu.memory_space<vmem>>, vector<8x64xf32>,
    return
  }
  func.func @transform_0(%arg0: i32, %arg1: memref<1xi32, #tpu.memory_space<smem>>) -> (i32, i32) {
    %c0_i32 = arith.constant 0 : i32
    %c0_i32_0 = arith.constant 0 : i32
    return %arg0, %c0_i32 : i32, i32
  }
  func.func @transform_1(%arg0: i32, %arg1: memref<1xi32, #tpu.memory_space<smem>>) -> (i32, i32) {
    %c0_i32 = arith.constant 0 : i32
    %c0_i32_0 = arith.constant 0 : i32
    %c0_i32_1 = arith.constant 0 : i32
    return %c0_i32, %c0_i32_0 : i32, i32
  }
  func.func @transform_2(%arg0: i32, %arg1: memref<1xi32, #tpu.memory_space<smem>>) -> (i32, i32) {
    %c0_i32 = arith.constant 0 : i32
    %c0_i32_0 = arith.constant 0 : i32
    %c0_i32_1 = arith.constant 0 : i32
    return %c0_i32, %c0_i32_0 : i32, i32
  }
  func.func @transform_3(%arg0: i32, %arg1: memref<1xi32, #tpu.memory_space<smem>>) -> (i32, i32) {
    %c0_i32 = arith.constant 0 : i32
    %c0_i32_0 = arith.constant 0 : i32
    %c0_i32_1 = arith.constant 0 : i32
    return %c0_i32, %c0_i32_0 : i32, i32
  }
  func.func @transform_4(%arg0: i32, %arg1: memref<1xi32, #tpu.memory_space<smem>>) -> (i32, i32) {
    %c0_i32 = arith.constant 0 : i32
    %c0_i32_0 = arith.constant 0 : i32
    %c0_i32_1 = arith.constant 0 : i32
    return %c0_i32, %c0_i32_0 : i32, i32
  }
  func.func @transform_5(%arg0: i32, %arg1: memref<1xi32, #tpu.memory_space<smem>>) -> (i32, i32) {
    %c0_i32 = arith.constant 0 : i32
    %c0_i32_0 = arith.constant 0 : i32
    return %arg0, %c0_i32 : i32, i32
  }
}

</mosaic_0001>

<llo_original>
// kernel: tpu_custom_call.1
$region0: #{tpu_custom_call.1}
  #allocation0 [shape = 'u32[]', space=smem, size = 0x4, offset = 0x4, fixed_abs, tag = 'smem constant byte address 0x4 - core index']
  #allocation1 [shape = 'u32[72,128]{1,0:T(1,128)}', space=vmem, size = 0x9000, scoped, tag = 'internal scratch']
  #allocation2 [shape = 's32[1]{0}', space=sflag, size = 0x4, scoped, tag = 'scoped memory for tpu_custom_call.1']
  #allocation3 [shape = 's32[1]{0:T(128)S(6)}', space=smem, size = 0x200, scoped, tag = 'prefetched SMEM operand 0']
  %s0 = inlined_call_operand.<no memory space> [shape: s32[1], index: 0, kind: input, shape index: {}]
  %s1 = inlined_call_operand.hbm [shape: f32[8,32], index: 1, kind: input, shape index: {}]
  %s2 = inlined_call_operand.hbm [shape: f32[32,64], index: 2, kind: input, shape index: {}]
  %s3 = inlined_call_operand.vmem [shape: f32[1,64], index: 3, kind: input, shape index: {}]
  %s4 = inlined_call_operand.vmem [shape: f32[1,64], index: 4, kind: input, shape index: {}]
  %s5 = inlined_call_operand.vmem [shape: f32[1,64], index: 5, kind: input, shape index: {}]
  %s6 = inlined_call_operand.hbm [shape: f32[8,64], index: 6, kind: output, shape index: {}]
  %s7 = sld [smem:[#allocation0]]
  $region38: #{tpu_custom_call.1} parent=0
    _
  %s9 = ssub.s32 1, %s7
  %s10 = scalar_select 0, %s9, %s7
  %11 = sst [smem:[#allocation3]] %s0
  $region1: #{tpu_custom_call.1} parent=0
    #allocation4 [shape = 'u8[4096]{0}', space=vmem, size = 0x1000, scoped, tag = 'input window, operand 1, single buffered']
    #allocation5 [shape = 's32[1]{0}', space=sflag, size = 0x4, scoped, tag = 'scoped memory for tpu_custom_call.1']
    #allocation6 [shape = 's32[1]{0}', space=sflag, size = 0x4, scoped, tag = 'scoped memory for tpu_custom_call.1']
    #allocation7 [shape = 'u8[16384]{0}', space=vmem, size = 0x4000, scoped, tag = 'input window, operand 2, single buffered']
    #allocation8 [shape = 's32[1]{0}', space=sflag, size = 0x4, scoped, tag = 'scoped memory for tpu_custom_call.1']
    #allocation9 [shape = 'u8[4096]{0}', space=vmem, size = 0x1000, scoped, tag = 'output window, operand 0, single buffered']
    %12 = vsyncpa [#allocation5], 0
    %13 = vsyncpa [#allocation8], 0
    %14 = vsyncpa [#allocation6], 0
    // Predicated region
    $region2: #{tpu_custom_call.1} parent=1 // pred_check
      _
    $region3: #{tpu_custom_call.1} parent=1 // pred_check_branch
      %16 = sbr.rel (0) target = $region5
    $region4: #{tpu_custom_call.1} parent=1 // pred_region
      %18 = vsyncadd [#allocation5], 0
      %s20 = sshll.u32 %s1, 4
      %s21 = int_to_ptr.hbm [resolvable:$true] %s20
      %s22 = sshll.u32 [#allocation4], 4
      %s23 = int_to_ptr.vmem [resolvable:$true] %s22
      %25 = dma.hbm_to_vmem [thread:$0]  %s21, 128, %s23, [#allocation5]
    $region5: #{tpu_custom_call.1} parent=1 // pred_fallthru
      _
    // Predicated region
    $region6: #{tpu_custom_call.1} parent=1 // pred_check
      _
    $region7: #{tpu_custom_call.1} parent=1 // pred_check_branch
      %27 = sbr.rel (0) target = $region9
    $region8: #{tpu_custom_call.1} parent=1 // pred_region
      %29 = vsyncadd [#allocation8], 0
      %s30 = sshll.u32 %s2, 4
      %s31 = int_to_ptr.hbm [resolvable:$true] %s30
      %s32 = sshll.u32 [#allocation7], 4
      %s33 = int_to_ptr.vmem [resolvable:$true] %s32
      %38 = dma.hbm_to_vmem [thread:$0]  %s31, 512, %s33, [#allocation8], 128, 128, 8
    $region9: #{tpu_custom_call.1} parent=1 // pred_fallthru
      _
    // Predicated region
    $region10: #{tpu_custom_call.1} parent=1 // pred_check
      _
    $region11: #{tpu_custom_call.1} parent=1 // pred_check_branch
      %40 = sbr.rel (0) target = $region13
    $region12: #{tpu_custom_call.1} parent=1 // pred_region
      _
    $region13: #{tpu_custom_call.1} parent=1 // pred_fallthru
      _
    // Predicated region
    $region14: #{tpu_custom_call.1} parent=1 // pred_check
      _
    $region15: #{tpu_custom_call.1} parent=1 // pred_check_branch
      %42 = sbr.rel (0) target = $region17
    $region16: #{tpu_custom_call.1} parent=1 // pred_region
      _
    $region17: #{tpu_custom_call.1} parent=1 // pred_fallthru
      _
    // Predicated region
    $region18: #{tpu_custom_call.1} parent=1 // pred_check
      _
    $region19: #{tpu_custom_call.1} parent=1 // pred_check_branch
      %44 = sbr.rel (0) target = $region21
    $region20: #{tpu_custom_call.1} parent=1 // pred_region
      _
    $region21: #{tpu_custom_call.1} parent=1 // pred_fallthru
      _
    // Predicated region
    $region22: #{tpu_custom_call.1} parent=1 // pred_check
      _
    $region23: #{tpu_custom_call.1} parent=1 // pred_check_branch
      %46 = sbr.rel (0) target = $region25
    $region24: #{tpu_custom_call.1} parent=1 // pred_region
      %48 = dma.done [#allocation5], 128
    $region25: #{tpu_custom_call.1} parent=1 // pred_fallthru
      _
    // Predicated region
    $region26: #{tpu_custom_call.1} parent=1 // pred_check
      _
    $region27: #{tpu_custom_call.1} parent=1 // pred_check_branch
      %50 = sbr.rel (0) target = $region29
    $region28: #{tpu_custom_call.1} parent=1 // pred_region
      %52 = dma.done [#allocation8], 512
    $region29: #{tpu_custom_call.1} parent=1 // pred_fallthru
      _
    %v53 = vld [vmem:[#allocation4] sm:$0xff]
    %v54 = vld [vmem:[#allocation7] sm:$0xff]
    %v55 = vld [vmem:[#allocation7 + $0x8] sm:$0xff]
    %v56 = vld [vmem:[#allocation7 + $0x10] sm:$0xff]
    %v57 = vld [vmem:[#allocation7 + $0x18] sm:$0xff]
    %v58 = vld [vmem:[%s3] sm:$0x1]
    %v60 = vperm.slane %v58, 0
    %vm62 = vcmask 261120
    %v64 = vsel %vm62, %v53, 0
    %66 = vmatpush.msra.mxu0 0.0
    %67 = vmatpush.msra.mxu0 0.0
    %68 = vmatpush.msra.mxu0 0.0
    %69 = vmatpush.msra.mxu0 0.0
    %70 = vmatpush.msra.mxu0 0.0
    %71 = vmatpush.msra.mxu0 0.0
    %72 = vmatpush.msra.mxu0 0.0
    %73 = vmatpush.msra.mxu0 0.0
    %74 = vmatpush.msra.mxu0 0.0
    %75 = vmatpush.msra.mxu0 0.0
    %76 = vmatpush.msra.mxu0 0.0
    %77 = vmatpush.msra.mxu0 0.0
    %78 = vmatpush.msra.mxu0 %v57
    %79 = vmatpush.msra.mxu0 %v56
    %80 = vmatpush.msra.mxu0 %v55
    %81 = vmatpush.msra.mxu0 %v54
    %82 = vmatmul.f32.gmra.mxu0 %v64
    %v83 = vpop.f32.mrf.mxu0
    %v84 = vadd.f32 %v60, %v83
    %85 = vdwg.mxu0
    %v86 = vmax.f32 %v84, 0.0
    %vm87 = vcmask 523264
    %88 = vst.msk [vmem:[#allocation9] sm:$0xff] %vm87, %v86
    // Predicated region
    $region30: #{tpu_custom_call.1} parent=1 // pred_check
      _
    $region31: #{tpu_custom_call.1} parent=1 // pred_check_branch
      %90 = sbr.rel (0) target = $region33
    $region32: #{tpu_custom_call.1} parent=1 // pred_region
      %92 = vsyncadd [#allocation6], 0
      %s94 = sshll.u32 [#allocation9], 4
      %s95 = int_to_ptr.vmem [resolvable:$true] %s94
      %s96 = sshll.u32 %s6, 4
      %s97 = int_to_ptr.hbm [resolvable:$true] %s96
      %99 = dma.vmem_to_hbm [thread:$0]  %s95, 128, %s97, [#allocation6]
    $region33: #{tpu_custom_call.1} parent=1 // pred_fallthru
      _
    // Predicated region
    $region34: #{tpu_custom_call.1} parent=1 // pred_check
      _
    $region35: #{tpu_custom_call.1} parent=1 // pred_check_branch
      %101 = sbr.rel (0) target = $region37
    $region36: #{tpu_custom_call.1} parent=1 // pred_region
      %103 = dma.done [#allocation6], 128
    $region37: #{tpu_custom_call.1} parent=1 // pred_fallthru
      _
    %104 = vsyncpa [#allocation5], 1
    %105 = vsyncpa [#allocation8], 1
    %106 = vsyncpa [#allocation6], 1

</llo_original>
